<compile_context>
chip_gen: v7x
topology: tpu7x:2x2x1
jax: 0.10.0
libtpu: 0.0.40
codegen_flags: <defaults>
</compile_context>

<pallas_src>
import jax
import jax.numpy as jnp
from jax.experimental import pallas as pl
from jax.experimental.pallas import tpu as pltpu

BINS = (-3, -2, -1, 0, 1, 2, 3)          # 7 bins -> vocab of len(bins)+1 = 8
NUM_EMBEDDINGS = len(BINS) + 1           # 8
DISTANCE_DIM = 20


def distance_kernel(lengths_ref, table_ref, out_ref):
    """lengths_ref: [TILE_N, 1] int32; table_ref: [V, D] f32; out_ref: [TILE_N, D] f32."""
    lengths = lengths_ref[...]                                   # [TN, 1] int32
    tn = lengths.shape[0]
    vocab, d = table_ref.shape

    # stoi: bins are the consecutive integers -3..3, so the bucket index is
    # exactly clamp(x + 4, 0, 7).  (2 VPU ops instead of 14.)
    idx = jnp.clip(lengths + 4, 0, vocab - 1)                    # [TN, 1] in [0, 7]

    # Embedding lookup as an unrolled 8-way VPU select-accumulate (avoids the
    # tiny-K one-hot MXU matmul, which would be ~pure padding at K=8, N=20).
    table = table_ref[...]                                       # [V, D] f32
    acc = jnp.zeros((tn, d), dtype=jnp.float32)
    for v in range(vocab):                                       # static unroll, V=8
        sel = (idx == v).astype(jnp.float32)                     # [TN, 1]
        acc = acc + sel * table[v, :][None, :]                   # bcast -> [TN, D]

    # Dropout(0.2) in eval mode == identity.
    out_ref[...] = acc.astype(out_ref.dtype)


def distance_forward(lengths, table, *, tile_n=2048):
    """lengths: int array [N]; table: [NUM_EMBEDDINGS, D] float.

    Returns [N, D] embeddings, row n = table[clamp(lengths[n]+4, 0, 7)].
    """
    n = int(lengths.shape[0])
    v, d = table.shape

    # Tile size: multiple of 8, no larger than the (rounded-up) row count.
    tile_n = int(min(tile_n, ((n + 7) // 8) * 8))
    tile_n = max(tile_n, 8)
    num_tiles = pl.cdiv(n, tile_n)
    n_pad = num_tiles * tile_n

    lengths_i32 = lengths.astype(jnp.int32)
    if n_pad != n:
        # Padded rows bucketize to a valid index (4); their output rows are
        # sliced away below, so only the writeback extent is padded.
        lengths_i32 = jnp.pad(lengths_i32, (0, n_pad - n))
    lengths_2d = lengths_i32.reshape(n_pad, 1)

    out = pl.pallas_call(
        distance_kernel,
        out_shape=jax.ShapeDtypeStruct((n_pad, d), table.dtype),
        grid=(num_tiles,),
        in_specs=[
            pl.BlockSpec((tile_n, 1), lambda i: (i, 0)),
            pl.BlockSpec((v, d), lambda i: (0, 0)),
        ],
        out_specs=pl.BlockSpec((tile_n, d), lambda i: (i, 0)),
        compiler_params=pltpu.CompilerParams(
            dimension_semantics=("parallel",)),
    )(lengths_2d, table)

    return out[:n] if n_pad != n else out


def _reference(lengths, table):
    """Pure-JAX reference for correctness check."""
    bins = jnp.array(BINS, dtype=jnp.int32)
    idx = jnp.sum(lengths[:, None] >= bins[None, :], axis=-1).astype(jnp.int32)
    return jnp.take(table, idx, axis=0)


if __name__ == "__main__":
    key = jax.random.PRNGKey(0)
    k_tab, k_len1, k_len2 = jax.random.split(key, 3)

    # Deterministic parameter init (nn.Embedding(8, 20) weight).
    table = jax.random.normal(k_tab, (NUM_EMBEDDINGS, DISTANCE_DIM),
                              dtype=jnp.float32)

    # Small example input: 8 integer "lengths" spanning all buckets.
    lengths = jax.random.randint(k_len1, (8,), minval=-5, maxval=6,
                                 dtype=jnp.int32)
    out = jax.block_until_ready(distance_forward(lengths, table))
    ref = _reference(lengths, table)
    assert out.shape == (8, DISTANCE_DIM), out.shape
    assert jnp.allclose(out, ref, atol=1e-6), "mismatch vs reference (N=8)"

    # Second small check exercising the grid + tail-padding path (N % tile != 0).
    lengths_tail = jax.random.randint(k_len2, (37,), minval=-8, maxval=9,
                                      dtype=jnp.int32)
    out_tail = jax.block_until_ready(
        distance_forward(lengths_tail, table, tile_n=16))
    ref_tail = _reference(lengths_tail, table)
    assert out_tail.shape == (37, DISTANCE_DIM), out_tail.shape
    assert jnp.allclose(out_tail, ref_tail, atol=1e-6), "mismatch vs reference (N=37)"

    print("KERNEL_OK")
</pallas_src>

<mosaic_0001>
module attributes {stable_mosaic.version = 11 : i64} {
  func.func @distance_kernel(%arg0: i32, %arg1: memref<8x1xi32, #tpu.memory_space<vmem>>, %arg2: memref<8x20xf32, #tpu.memory_space<vmem>>, %arg3: memref<8x20xf32, #tpu.memory_space<vmem>>) attributes {dimension_semantics = [#tpu.dimension_semantics<parallel>], iteration_bounds = array<i64: 1>, scalar_prefetch = 0 : i64, scratch_operands = 0 : i64, tpu.core_type = #tpu.core_type<tc>, window_params = [{transform_indices = @transform_0, window_bounds = array<i64: 8, 1>}, {pipeline_mode = #tpu.pipeline_mode<synchronous>, transform_indices = @transform_1, window_bounds = array<i64: 8, 20>}, {transform_indices = @transform_2, window_bounds = array<i64: 8, 20>}]} {
    %c0 = arith.constant 0 : index
    %c0_0 = arith.constant 0 : index
    %0 = vector.load %arg1[%c0, %c0_0] : memref<8x1xi32, #tpu.memory_space<vmem>>, vector<8x1xi32>
    %c4_i32 = arith.constant 4 : i32
    %1 = vector.broadcast %c4_i32 : i32 to vector<8x1xi32>
    %2 = arith.addi %0, %1 : vector<8x1xi32>
    %c0_i32 = arith.constant 0 : i32
    %c7_i32 = arith.constant 7 : i32
    %3 = vector.broadcast %c0_i32 : i32 to vector<8x1xi32>
    %4 = arith.maxsi %3, %2 : vector<8x1xi32>
    %5 = vector.broadcast %c7_i32 : i32 to vector<8x1xi32>
    %6 = arith.minsi %5, %4 : vector<8x1xi32>
    %c0_1 = arith.constant 0 : index
    %c0_2 = arith.constant 0 : index
    %7 = vector.load %arg2[%c0_1, %c0_2] : memref<8x20xf32, #tpu.memory_space<vmem>>, vector<8x20xf32>
    %cst = arith.constant 0.000000e+00 : f32
    %8 = vector.broadcast %cst : f32 to vector<8x20xf32>
    %c0_i32_3 = arith.constant 0 : i32
    %9 = vector.broadcast %c0_i32_3 : i32 to vector<8x1xi32>
    %10 = arith.cmpi eq, %6, %9 : vector<8x1xi32>
    %11 = arith.extui %10 : vector<8x1xi1> to vector<8x1xi32>
    %12 = arith.sitofp %11 : vector<8x1xi32> to vector<8x1xf32>
    %13 = vector.extract_strided_slice %7 {offsets = [0, 0], sizes = [1, 20], strides = [1, 1]} : vector<8x20xf32> to vector<1x20xf32>
    %14 = vector.shape_cast %13 : vector<1x20xf32> to vector<20xf32>
    %15 = vector.shape_cast %14 : vector<20xf32> to vector<1x20xf32>
    %16 = vector.broadcast %12 : vector<8x1xf32> to vector<8x20xf32>
    %17 = vector.broadcast %15 : vector<1x20xf32> to vector<8x20xf32>
    %18 = arith.mulf %16, %17 : vector<8x20xf32>
    %19 = arith.addf %8, %18 : vector<8x20xf32>
    %c1_i32 = arith.constant 1 : i32
    %20 = vector.broadcast %c1_i32 : i32 to vector<8x1xi32>
    %21 = arith.cmpi eq, %6, %20 : vector<8x1xi32>
    %22 = arith.extui %21 : vector<8x1xi1> to vector<8x1xi32>
    %23 = arith.sitofp %22 : vector<8x1xi32> to vector<8x1xf32>
    %24 = vector.extract_strided_slice %7 {offsets = [1, 0], sizes = [1, 20], strides = [1, 1]} : vector<8x20xf32> to vector<1x20xf32>
    %25 = vector.shape_cast %24 : vector<1x20xf32> to vector<20xf32>
    %26 = vector.shape_cast %25 : vector<20xf32> to vector<1x20xf32>
    %27 = vector.broadcast %23 : vector<8x1xf32> to vector<8x20xf32>
    %28 = vector.broadcast %26 : vector<1x20xf32> to vector<8x20xf32>
    %29 = arith.mulf %27, %28 : vector<8x20xf32>
    %30 = arith.addf %19, %29 : vector<8x20xf32>
    %c2_i32 = arith.constant 2 : i32
    %31 = vector.broadcast %c2_i32 : i32 to vector<8x1xi32>
    %32 = arith.cmpi eq, %6, %31 : vector<8x1xi32>
    %33 = arith.extui %32 : vector<8x1xi1> to vector<8x1xi32>
    %34 = arith.sitofp %33 : vector<8x1xi32> to vector<8x1xf32>
    %35 = vector.extract_strided_slice %7 {offsets = [2, 0], sizes = [1, 20], strides = [1, 1]} : vector<8x20xf32> to vector<1x20xf32>
    %36 = vector.shape_cast %35 : vector<1x20xf32> to vector<20xf32>
    %37 = vector.shape_cast %36 : vector<20xf32> to vector<1x20xf32>
    %38 = vector.broadcast %34 : vector<8x1xf32> to vector<8x20xf32>
    %39 = vector.broadcast %37 : vector<1x20xf32> to vector<8x20xf32>
    %40 = arith.mulf %38, %39 : vector<8x20xf32>
    %41 = arith.addf %30, %40 : vector<8x20xf32>
    %c3_i32 = arith.constant 3 : i32
    %42 = vector.broadcast %c3_i32 : i32 to vector<8x1xi32>
    %43 = arith.cmpi eq, %6, %42 : vector<8x1xi32>
    %44 = arith.extui %43 : vector<8x1xi1> to vector<8x1xi32>
    %45 = arith.sitofp %44 : vector<8x1xi32> to vector<8x1xf32>
    %46 = vector.extract_strided_slice %7 {offsets = [3, 0], sizes = [1, 20], strides = [1, 1]} : vector<8x20xf32> to vector<1x20xf32>
    %47 = vector.shape_cast %46 : vector<1x20xf32> to vector<20xf32>
    %48 = vector.shape_cast %47 : vector<20xf32> to vector<1x20xf32>
    %49 = vector.broadcast %45 : vector<8x1xf32> to vector<8x20xf32>
    %50 = vector.broadcast %48 : vector<1x20xf32> to vector<8x20xf32>
    %51 = arith.mulf %49, %50 : vector<8x20xf32>
    %52 = arith.addf %41, %51 : vector<8x20xf32>
    %c4_i32_4 = arith.constant 4 : i32
    %53 = vector.broadcast %c4_i32_4 : i32 to vector<8x1xi32>
    %54 = arith.cmpi eq, %6, %53 : vector<8x1xi32>
    %55 = arith.extui %54 : vector<8x1xi1> to vector<8x1xi32>
    %56 = arith.sitofp %55 : vector<8x1xi32> to vector<8x1xf32>
    %57 = vector.extract_strided_slice %7 {offsets = [4, 0], sizes = [1, 20], strides = [1, 1]} : vector<8x20xf32> to vector<1x20xf32>
    %58 = vector.shape_cast %57 : vector<1x20xf32> to vector<20xf32>
    %59 = vector.shape_cast %58 : vector<20xf32> to vector<1x20xf32>
    %60 = vector.broadcast %56 : vector<8x1xf32> to vector<8x20xf32>
    %61 = vector.broadcast %59 : vector<1x20xf32> to vector<8x20xf32>
    %62 = arith.mulf %60, %61 : vector<8x20xf32>
    %63 = arith.addf %52, %62 : vector<8x20xf32>
    %c5_i32 = arith.constant 5 : i32
    %64 = vector.broadcast %c5_i32 : i32 to vector<8x1xi32>
    %65 = arith.cmpi eq, %6, %64 : vector<8x1xi32>
    %66 = arith.extui %65 : vector<8x1xi1> to vector<8x1xi32>
    %67 = arith.sitofp %66 : vector<8x1xi32> to vector<8x1xf32>
    %68 = vector.extract_strided_slice %7 {offsets = [5, 0], sizes = [1, 20], strides = [1, 1]} : vector<8x20xf32> to vector<1x20xf32>
    %69 = vector.shape_cast %68 : vector<1x20xf32> to vector<20xf32>
    %70 = vector.shape_cast %69 : vector<20xf32> to vector<1x20xf32>
    %71 = vector.broadcast %67 : vector<8x1xf32> to vector<8x20xf32>
    %72 = vector.broadcast %70 : vector<1x20xf32> to vector<8x20xf32>
    %73 = arith.mulf %71, %72 : vector<8x20xf32>
    %74 = arith.addf %63, %73 : vector<8x20xf32>
    %c6_i32 = arith.constant 6 : i32
    %75 = vector.broadcast %c6_i32 : i32 to vector<8x1xi32>
    %76 = arith.cmpi eq, %6, %75 : vector<8x1xi32>
    %77 = arith.extui %76 : vector<8x1xi1> to vector<8x1xi32>
    %78 = arith.sitofp %77 : vector<8x1xi32> to vector<8x1xf32>
    %79 = vector.extract_strided_slice %7 {offsets = [6, 0], sizes = [1, 20], strides = [1, 1]} : vector<8x20xf32> to vector<1x20xf32>
    %80 = vector.shape_cast %79 : vector<1x20xf32> to vector<20xf32>
    %81 = vector.shape_cast %80 : vector<20xf32> to vector<1x20xf32>
    %82 = vector.broadcast %78 : vector<8x1xf32> to vector<8x20xf32>
    %83 = vector.broadcast %81 : vector<1x20xf32> to vector<8x20xf32>
    %84 = arith.mulf %82, %83 : vector<8x20xf32>
    %85 = arith.addf %74, %84 : vector<8x20xf32>
    %c7_i32_5 = arith.constant 7 : i32
    %86 = vector.broadcast %c7_i32_5 : i32 to vector<8x1xi32>
    %87 = arith.cmpi eq, %6, %86 : vector<8x1xi32>
    %88 = arith.extui %87 : vector<8x1xi1> to vector<8x1xi32>
    %89 = arith.sitofp %88 : vector<8x1xi32> to vector<8x1xf32>
    %90 = vector.extract_strided_slice %7 {offsets = [7, 0], sizes = [1, 20], strides = [1, 1]} : vector<8x20xf32> to vector<1x20xf32>
    %91 = vector.shape_cast %90 : vector<1x20xf32> to vector<20xf32>
    %92 = vector.shape_cast %91 : vector<20xf32> to vector<1x20xf32>
    %93 = vector.broadcast %89 : vector<8x1xf32> to vector<8x20xf32>
    %94 = vector.broadcast %92 : vector<1x20xf32> to vector<8x20xf32>
    %95 = arith.mulf %93, %94 : vector<8x20xf32>
    %96 = arith.addf %85, %95 : vector<8x20xf32>
    %c0_6 = arith.constant 0 : index
    %c0_7 = arith.constant 0 : index
    %97 = vector.load %arg3[%c0_6, %c0_7] : memref<8x20xf32, #tpu.memory_space<vmem>>, vector<8x20xf32>
    tpu.vector_store %arg3[%c0_6, %c0_7], %96 {strides = array<i32>} : memref<8x20xf32, #tpu.memory_space<vmem>>, vector<8x20xf32>,
    return
  }
  func.func @transform_0(%arg0: i32) -> (i32, i32) {
    %c0_i32 = arith.constant 0 : i32
    %c0_i32_0 = arith.constant 0 : i32
    return %arg0, %c0_i32 : i32, i32
  }
  func.func @transform_1(%arg0: i32) -> (i32, i32) {
    %c0_i32 = arith.constant 0 : i32
    %c0_i32_0 = arith.constant 0 : i32
    %c0_i32_1 = arith.constant 0 : i32
    return %c0_i32, %c0_i32_0 : i32, i32
  }
  func.func @transform_2(%arg0: i32) -> (i32, i32) {
    %c0_i32 = arith.constant 0 : i32
    %c0_i32_0 = arith.constant 0 : i32
    return %arg0, %c0_i32 : i32, i32
  }
}

</mosaic_0001>

<llo_original>
// kernel: tpu_custom_call.1
$region0: #{tpu_custom_call.1}
  #allocation0 [shape = 'u32[]', space=smem, size = 0x4, offset = 0x4, fixed_abs, tag = 'smem constant byte address 0x4 - core index']
  #allocation1 [shape = 'u32[144,128]{1,0:T(1,128)}', space=vmem, size = 0x12000, scoped, tag = 'internal scratch']
  %s0 = inlined_call_operand.vmem [shape: s32[8,1], index: 0, kind: input, shape index: {}]
  %s1 = inlined_call_operand.vmem [shape: f32[8,20], index: 1, kind: input, shape index: {}]
  %s2 = inlined_call_operand.hbm [shape: f32[8,20], index: 2, kind: output, shape index: {}]
  %s3 = sld [smem:[#allocation0]]
  $region18: #{tpu_custom_call.1} parent=0
    _
  %s5 = ssub.s32 1, %s3
  %s6 = scalar_select 0, %s5, %s3
  $region1: #{tpu_custom_call.1} parent=0
    #allocation2 [shape = 'u8[4096]{0}', space=vmem, size = 0x1000, scoped, tag = 'output window, operand 0, single buffered']
    #allocation3 [shape = 's32[1]{0}', space=sflag, size = 0x4, scoped, tag = 'scoped memory for tpu_custom_call.1']
    %7 = vsyncpa [#allocation3], 0
    // Predicated region
    $region2: #{tpu_custom_call.1} parent=1 // pred_check
      _
    $region3: #{tpu_custom_call.1} parent=1 // pred_check_branch
      %9 = sbr.rel (0) target = $region5
    $region4: #{tpu_custom_call.1} parent=1 // pred_region
      _
    $region5: #{tpu_custom_call.1} parent=1 // pred_fallthru
      _
    // Predicated region
    $region6: #{tpu_custom_call.1} parent=1 // pred_check
      _
    $region7: #{tpu_custom_call.1} parent=1 // pred_check_branch
      %11 = sbr.rel (0) target = $region9
    $region8: #{tpu_custom_call.1} parent=1 // pred_region
      _
    $region9: #{tpu_custom_call.1} parent=1 // pred_fallthru
      _
    %v12 = vld [vmem:[%s0] sm:$0xff]
    %v13 = vadd.s32 %v12, 4
    %vm14 = vcmp.gt.s32.totalorder %v13, 0
    %v15 = vsel %vm14, %v13, 0
    %vm16 = vcmp.lt.s32.totalorder %v15, 7
    %v17 = vsel %vm16, %v15, 7
    %v18 = vld [vmem:[%s1] sm:$0xff]
    %vm19 = vcmp.eq.s32.totalorder %v17, 0
    %v20 = vsel %vm19, 1, 0
    %v21 = vcvt.s32.f32 %v20
    %23 = vset.pattern.permute.xlu0 0
    %24 = vperm.xlu0 %23, %v21
    %v25 = vpop.permute.xlu0 %24
    %v27 = vlaneseq
    %v28 = vshrl.u32 %v27, 7
    %v29 = vsub.s32 0, %v28
    %v30 = vrot.slane %v18, %v29
    %v31 = vmul.f32 %v25, %v30
    %v32 = vadd.f32 %v31, 0.0
    %vm33 = vcmp.eq.s32.totalorder %v17, 1
    %v34 = vsel %vm33, 1, 0
    %v35 = vcvt.s32.f32 %v34
    %37 = vset.pattern.permute.xlu0 0
    %38 = vperm.xlu0 %37, %v35
    %v39 = vpop.permute.xlu0 %38
    %v41 = vlaneseq
    %v42 = vshrl.u32 %v41, 7
    %v43 = vsub.s32 1, %v42
    %v44 = vrot.slane %v18, %v43
    %v45 = vmul.f32 %v39, %v44
    %v46 = vadd.f32 %v32, %v45
    %vm47 = vcmp.eq.s32.totalorder %v17, 2
    %v48 = vsel %vm47, 1, 0
    %v49 = vcvt.s32.f32 %v48
    %51 = vset.pattern.permute.xlu0 0
    %52 = vperm.xlu0 %51, %v49
    %v53 = vpop.permute.xlu0 %52
    %v55 = vlaneseq
    %v56 = vshrl.u32 %v55, 7
    %v57 = vsub.s32 2, %v56
    %v58 = vrot.slane %v18, %v57
    %v59 = vmul.f32 %v53, %v58
    %v60 = vadd.f32 %v46, %v59
    %vm61 = vcmp.eq.s32.totalorder %v17, 3
    %v62 = vsel %vm61, 1, 0
    %v63 = vcvt.s32.f32 %v62
    %65 = vset.pattern.permute.xlu0 0
    %66 = vperm.xlu0 %65, %v63
    %v67 = vpop.permute.xlu0 %66
    %v69 = vlaneseq
    %v70 = vshrl.u32 %v69, 7
    %v71 = vsub.s32 3, %v70
    %v72 = vrot.slane %v18, %v71
    %v73 = vmul.f32 %v67, %v72
    %v74 = vadd.f32 %v60, %v73
    %vm75 = vcmp.eq.s32.totalorder %v17, 4
    %v76 = vsel %vm75, 1, 0
    %v77 = vcvt.s32.f32 %v76
    %79 = vset.pattern.permute.xlu0 0
    %80 = vperm.xlu0 %79, %v77
    %v81 = vpop.permute.xlu0 %80
    %v83 = vlaneseq
    %v84 = vshrl.u32 %v83, 7
    %v85 = vsub.s32 4, %v84
    %v86 = vrot.slane %v18, %v85
    %v87 = vmul.f32 %v81, %v86
    %v88 = vadd.f32 %v74, %v87
    %vm89 = vcmp.eq.s32.totalorder %v17, 5
    %v90 = vsel %vm89, 1, 0
    %v91 = vcvt.s32.f32 %v90
    %93 = vset.pattern.permute.xlu0 0
    %94 = vperm.xlu0 %93, %v91
    %v95 = vpop.permute.xlu0 %94
    %v97 = vlaneseq
    %v98 = vshrl.u32 %v97, 7
    %v99 = vsub.s32 5, %v98
    %v100 = vrot.slane %v18, %v99
    %v101 = vmul.f32 %v95, %v100
    %v102 = vadd.f32 %v88, %v101
    %vm103 = vcmp.eq.s32.totalorder %v17, 6
    %v104 = vsel %vm103, 1, 0
    %v105 = vcvt.s32.f32 %v104
    %107 = vset.pattern.permute.xlu0 0
    %108 = vperm.xlu0 %107, %v105
    %v109 = vpop.permute.xlu0 %108
    %v111 = vlaneseq
    %v112 = vshrl.u32 %v111, 7
    %v113 = vsub.s32 6, %v112
    %v114 = vrot.slane %v18, %v113
    %v115 = vmul.f32 %v109, %v114
    %v116 = vadd.f32 %v102, %v115
    %vm117 = vcmp.eq.s32.totalorder %v17, 7
    %v118 = vsel %vm117, 1, 0
    %v119 = vcvt.s32.f32 %v118
    %121 = vset.pattern.permute.xlu0 0
    %122 = vperm.xlu0 %121, %v119
    %v123 = vpop.permute.xlu0 %122
    %v125 = vlaneseq
    %v126 = vshrl.u32 %v125, 7
    %v127 = vsub.s32 7, %v126
    %v128 = vrot.slane %v18, %v127
    %v129 = vmul.f32 %v123, %v128
    %v130 = vadd.f32 %v116, %v129
    %vm131 = vcmask 162816
    %132 = vst.msk [vmem:[#allocation2] sm:$0xff] %vm131, %v130
    // Predicated region
    $region10: #{tpu_custom_call.1} parent=1 // pred_check
      _
    $region11: #{tpu_custom_call.1} parent=1 // pred_check_branch
      %134 = sbr.rel (0) target = $region13
    $region12: #{tpu_custom_call.1} parent=1 // pred_region
      %s136 = ssub.s32 128, 128
      %137 = vsyncadd [#allocation3], %s136
      %s139 = sshll.u32 [#allocation2], 4
      %s140 = int_to_ptr.vmem [resolvable:$true] %s139
      %142 = dma.vmem_to_hbm [thread:$0]  %s140, 128, %s2, [#allocation3]
    $region13: #{tpu_custom_call.1} parent=1 // pred_fallthru
      _
    // Predicated region
    $region14: #{tpu_custom_call.1} parent=1 // pred_check
      _
    $region15: #{tpu_custom_call.1} parent=1 // pred_check_branch
      %144 = sbr.rel (0) target = $region17
    $region16: #{tpu_custom_call.1} parent=1 // pred_region
      %145 = dma.done [#allocation3], 128
    $region17: #{tpu_custom_call.1} parent=1 // pred_fallthru
      _
    %146 = vsyncpa [#allocation3], 1

</llo_original>
